<compile_context>
chip_gen: v5e
topology: v5e:2x2
jax: 0.10.0
libtpu: 0.0.40
codegen_flags: <defaults>
</compile_context>

<pallas_src>
import jax
import jax.numpy as jnp
from jax import lax
from jax.experimental import pallas as pl
from jax.experimental.pallas import tpu as pltpu


def _dwt_kernel(x_ref, m_ref, o_ref):
    """Fused Haar DWT on one block of row pairs.

    x_ref: (1, rb, 2W)   row r=(c,hh): [image row 2hh (W lanes) | image row 2hh+1]
    m_ref: (W, W)        constant; cols [0,Wh): +0.5 col-pair sum, [Wh,W): -/+0.5 diff
    o_ref: (1, 4, rb, Wh) sub-bands [LL, HL, LH, HH]
    """
    v = x_ref[0]                               # (rb, 2W)
    two_w = v.shape[-1]
    w = two_w // 2
    wh = w // 2

    a = v[:, :w]                               # even image rows
    b = v[:, w:]                               # odd image rows
    s = a + b                                  # row sum  (un-halved; m carries the 1/2)
    d = b - a                                  # row diff

    m = m_ref[...]
    sm = jnp.dot(s, m, preferred_element_type=jnp.float32,
                 precision=lax.Precision.HIGHEST)        # (rb, W) = [LL | HL]
    dm = jnp.dot(d, m, preferred_element_type=jnp.float32,
                 precision=lax.Precision.HIGHEST)        # (rb, W) = [LH | HH]

    dt = o_ref.dtype
    o_ref[0, 0, :, :] = sm[:, :wh].astype(dt)  # LL =  x1 + x2 + x3 + x4
    o_ref[0, 1, :, :] = sm[:, wh:].astype(dt)  # HL = -x1 - x2 + x3 + x4
    o_ref[0, 2, :, :] = dm[:, :wh].astype(dt)  # LH = -x1 + x2 - x3 + x4
    o_ref[0, 3, :, :] = dm[:, wh:].astype(dt)  # HH =  x1 - x2 - x3 + x4


def _column_haar_matrix(w):
    """(W, W) matrix: out cols [0,Wh) = 0.5*(even+odd) col pair, [Wh,W) = 0.5*(odd-even)."""
    wh = w // 2
    col = jnp.arange(w)
    j = col // 2
    sign = jnp.where(col % 2 == 0, -0.5, 0.5).astype(jnp.float32)
    m = jnp.zeros((w, w), jnp.float32)
    m = m.at[col, j].set(0.5)        # sum part  -> columns [0, Wh)
    m = m.at[col, wh + j].set(sign)  # diff part -> columns [Wh, W)
    return m


def _choose_row_block(n_rows, row_bytes, m_bytes, n_batch):
    """Rows (of the flattened C*Hh axis) per grid step."""
    # Per-step VMEM ~ 2x double-buffered input block + double-buffered output
    # (same bytes as input) + the resident column matrix (conservatively x2).
    budget = 48 * 1024 * 1024 - 2 * m_bytes
    target = min(4 * 1024 * 1024, max(row_bytes, budget // 4))
    rb = max(1, target // row_bytes)
    if rb >= n_rows:
        rb = n_rows
    else:
        rb = max(8, (rb // 8) * 8)             # (8,128) block rule: multiple of 8

    def steps(b):
        return n_batch * ((n_rows + b - 1) // b)

    # v7x megacore: prefer >= 2 parallel grid steps when the tensor allows it.
    while steps(rb) < 2 and rb > 8:
        rb = max(8, ((rb // 2) // 8) * 8)
    return rb


def dwt(x):
    """Pallas DWT: (N, C, H, W) -> (N, 4C, H//2, W//2), order [LL|HL|LH|HH]."""
    N, C, H, W = x.shape
    assert H % 2 == 0 and W % 2 == 0, "H and W must be even"
    assert jnp.issubdtype(x.dtype, jnp.floating), "DWT expects a floating dtype"
    Hh, Wh = H // 2, W // 2
    R = C * Hh
    two_w = 2 * W

    # Free bitcast reshape: each row pair (2i, 2i+1) becomes one 2W-wide row.
    xv = x.reshape(N, R, two_w)
    m = _column_haar_matrix(W)

    itemsize = jnp.dtype(x.dtype).itemsize
    rb = _choose_row_block(R, two_w * itemsize, W * W * 4, N)
    grid = (N, pl.cdiv(R, rb))

    out = pl.pallas_call(
        _dwt_kernel,
        out_shape=jax.ShapeDtypeStruct((N, 4, R, Wh), x.dtype),
        grid=grid,
        in_specs=[pl.BlockSpec((1, rb, two_w), lambda n, r: (n, r, 0)),
                  pl.BlockSpec((W, W), lambda n, r: (0, 0))],
        out_specs=pl.BlockSpec((1, 4, rb, Wh), lambda n, r: (n, 0, r, 0)),
        compiler_params=pltpu.CompilerParams(
            dimension_semantics=("parallel", "parallel"),
            vmem_limit_bytes=64 * 1024 * 1024),
    )(xv, m)

    # Free bitcast reshape: (N, 4, C*Hh, Wh) -> (N, 4C, Hh, Wh) == [LL|HL|LH|HH].
    return out.reshape(N, 4 * C, Hh, Wh)


def dwt_ref(x):
    """Pure-JAX reference mirroring the PyTorch dwt_init."""
    x01 = x[:, :, 0::2, :] / 2
    x02 = x[:, :, 1::2, :] / 2
    x1 = x01[:, :, :, 0::2]
    x2 = x02[:, :, :, 0::2]
    x3 = x01[:, :, :, 1::2]
    x4 = x02[:, :, :, 1::2]
    x_LL = x1 + x2 + x3 + x4
    x_HL = -x1 - x2 + x3 + x4
    x_LH = -x1 + x2 - x3 + x4
    x_HH = x1 - x2 - x3 + x4
    return jnp.concatenate([x_LL, x_HL, x_LH, x_HH], axis=1)


if __name__ == "__main__":
    key = jax.random.PRNGKey(0)
    dwt_jit = jax.jit(dwt)

    # Third shape exercises a ragged (cdiv) last row-block.
    for shape in [(2, 4, 16, 16), (1, 6, 32, 64), (1, 5, 24, 32)]:
        x = jax.random.normal(key, shape, dtype=jnp.float32)
        out = jax.block_until_ready(dwt_jit(x))
        ref = dwt_ref(x)
        N, C, H, W = shape
        assert out.shape == (N, 4 * C, H // 2, W // 2), out.shape
        assert jnp.allclose(out, ref, atol=1e-5, rtol=1e-5), "mismatch vs reference"

    print("KERNEL_OK")
</pallas_src>

<mosaic_0001>
module attributes {stable_mosaic.version = 11 : i64} {
  func.func @_dwt_kernel(%arg0: i32, %arg1: i32, %arg2: memref<1x32x32xf32, #tpu.memory_space<vmem>>, %arg3: memref<16x16xf32, #tpu.memory_space<vmem>>, %arg4: memref<1x4x32x8xf32, #tpu.memory_space<vmem>>) attributes {dimension_semantics = [#tpu.dimension_semantics<parallel>, #tpu.dimension_semantics<parallel>], iteration_bounds = array<i64: 2, 1>, scalar_prefetch = 0 : i64, scratch_operands = 0 : i64, tpu.core_type = #tpu.core_type<tc>, window_params = [{transform_indices = @transform_0, window_bounds = array<i64: 1, 32, 32>}, {pipeline_mode = #tpu.pipeline_mode<synchronous>, transform_indices = @transform_1, window_bounds = array<i64: 16, 16>}, {transform_indices = @transform_2, window_bounds = array<i64: 1, 4, 32, 8>}]} {
    %c0 = arith.constant 0 : index
    %c0_0 = arith.constant 0 : index
    %c0_1 = arith.constant 0 : index
    %0 = vector.load %arg2[%c0, %c0_0, %c0_1] : memref<1x32x32xf32, #tpu.memory_space<vmem>>, vector<1x32x32xf32>
    %1 = vector.shape_cast %0 : vector<1x32x32xf32> to vector<32x32xf32>
    %2 = vector.extract_strided_slice %1 {offsets = [0, 0], sizes = [32, 16], strides = [1, 1]} : vector<32x32xf32> to vector<32x16xf32>
    %3 = vector.extract_strided_slice %1 {offsets = [0, 16], sizes = [32, 16], strides = [1, 1]} : vector<32x32xf32> to vector<32x16xf32>
    %4 = arith.addf %2, %3 : vector<32x16xf32>
    %5 = arith.subf %3, %2 : vector<32x16xf32>
    %c0_2 = arith.constant 0 : index
    %c0_3 = arith.constant 0 : index
    %6 = vector.load %arg3[%c0_2, %c0_3] : memref<16x16xf32, #tpu.memory_space<vmem>>, vector<16x16xf32>
    %cst = arith.constant dense<0.000000e+00> : vector<32x16xf32>
    %7 = tpu.matmul %4, %6, %cst {dimension_numbers = #tpu.dot_dimension_numbers<[1], [0], [0], [1], [0, 0, 1, 1], [], []>, precision = #tpu.contract_precision<fp32>} : vector<32x16xf32>, vector<16x16xf32>, vector<32x16xf32> -> vector<32x16xf32>
    %cst_4 = arith.constant dense<0.000000e+00> : vector<32x16xf32>
    %8 = tpu.matmul %5, %6, %cst_4 {dimension_numbers = #tpu.dot_dimension_numbers<[1], [0], [0], [1], [0, 0, 1, 1], [], []>, precision = #tpu.contract_precision<fp32>} : vector<32x16xf32>, vector<16x16xf32>, vector<32x16xf32> -> vector<32x16xf32>
    %9 = vector.extract_strided_slice %7 {offsets = [0, 0], sizes = [32, 8], strides = [1, 1]} : vector<32x16xf32> to vector<32x8xf32>
    %c0_5 = arith.constant 0 : index
    %c0_6 = arith.constant 0 : index
    %c0_7 = arith.constant 0 : index
    %c0_8 = arith.constant 0 : index
    %10 = vector.load %arg4[%c0_5, %c0_6, %c0_7, %c0_8] : memref<1x4x32x8xf32, #tpu.memory_space<vmem>>, vector<1x1x32x8xf32>
    %11 = vector.shape_cast %10 : vector<1x1x32x8xf32> to vector<32x8xf32>
    %12 = vector.shape_cast %9 : vector<32x8xf32> to vector<1x1x32x8xf32>
    tpu.vector_store %arg4[%c0_5, %c0_6, %c0_7, %c0_8], %12 {strides = array<i32>} : memref<1x4x32x8xf32, #tpu.memory_space<vmem>>, vector<1x1x32x8xf32>,
    %13 = vector.extract_strided_slice %7 {offsets = [0, 8], sizes = [32, 8], strides = [1, 1]} : vector<32x16xf32> to vector<32x8xf32>
    %c0_9 = arith.constant 0 : index
    %c1 = arith.constant 1 : index
    %c0_10 = arith.constant 0 : index
    %c0_11 = arith.constant 0 : index
    %14 = vector.load %arg4[%c0_9, %c1, %c0_10, %c0_11] : memref<1x4x32x8xf32, #tpu.memory_space<vmem>>, vector<1x1x32x8xf32>
    %15 = vector.shape_cast %14 : vector<1x1x32x8xf32> to vector<32x8xf32>
    %16 = vector.shape_cast %13 : vector<32x8xf32> to vector<1x1x32x8xf32>
    tpu.vector_store %arg4[%c0_9, %c1, %c0_10, %c0_11], %16 {strides = array<i32>} : memref<1x4x32x8xf32, #tpu.memory_space<vmem>>, vector<1x1x32x8xf32>,
    %17 = vector.extract_strided_slice %8 {offsets = [0, 0], sizes = [32, 8], strides = [1, 1]} : vector<32x16xf32> to vector<32x8xf32>
    %c0_12 = arith.constant 0 : index
    %c2 = arith.constant 2 : index
    %c0_13 = arith.constant 0 : index
    %c0_14 = arith.constant 0 : index
    %18 = vector.load %arg4[%c0_12, %c2, %c0_13, %c0_14] : memref<1x4x32x8xf32, #tpu.memory_space<vmem>>, vector<1x1x32x8xf32>
    %19 = vector.shape_cast %18 : vector<1x1x32x8xf32> to vector<32x8xf32>
    %20 = vector.shape_cast %17 : vector<32x8xf32> to vector<1x1x32x8xf32>
    tpu.vector_store %arg4[%c0_12, %c2, %c0_13, %c0_14], %20 {strides = array<i32>} : memref<1x4x32x8xf32, #tpu.memory_space<vmem>>, vector<1x1x32x8xf32>,
    %21 = vector.extract_strided_slice %8 {offsets = [0, 8], sizes = [32, 8], strides = [1, 1]} : vector<32x16xf32> to vector<32x8xf32>
    %c0_15 = arith.constant 0 : index
    %c3 = arith.constant 3 : index
    %c0_16 = arith.constant 0 : index
    %c0_17 = arith.constant 0 : index
    %22 = vector.load %arg4[%c0_15, %c3, %c0_16, %c0_17] : memref<1x4x32x8xf32, #tpu.memory_space<vmem>>, vector<1x1x32x8xf32>
    %23 = vector.shape_cast %22 : vector<1x1x32x8xf32> to vector<32x8xf32>
    %24 = vector.shape_cast %21 : vector<32x8xf32> to vector<1x1x32x8xf32>
    tpu.vector_store %arg4[%c0_15, %c3, %c0_16, %c0_17], %24 {strides = array<i32>} : memref<1x4x32x8xf32, #tpu.memory_space<vmem>>, vector<1x1x32x8xf32>,
    return
  }
  func.func @transform_0(%arg0: i32, %arg1: i32) -> (i32, i32, i32) {
    %c0_i32 = arith.constant 0 : i32
    %c0_i32_0 = arith.constant 0 : i32
    return %arg0, %arg1, %c0_i32 : i32, i32, i32
  }
  func.func @transform_1(%arg0: i32, %arg1: i32) -> (i32, i32) {
    %c0_i32 = arith.constant 0 : i32
    %c0_i32_0 = arith.constant 0 : i32
    %c0_i32_1 = arith.constant 0 : i32
    return %c0_i32, %c0_i32_0 : i32, i32
  }
  func.func @transform_2(%arg0: i32, %arg1: i32) -> (i32, i32, i32, i32) {
    %c0_i32 = arith.constant 0 : i32
    %c0_i32_0 = arith.constant 0 : i32
    %c0_i32_1 = arith.constant 0 : i32
    return %arg0, %c0_i32, %arg1, %c0_i32_0 : i32, i32, i32, i32
  }
}

</mosaic_0001>

<llo_original>
// kernel: dwt.1
$region0: #{dwt.1}
  #allocation0 [shape = 'u32[]', space=smem, size = 0x4, offset = 0x4, fixed_abs, tag = 'smem constant byte address 0x4 - core index']
  #allocation1 [shape = 'u32[72,128]{1,0:T(1,128)}', space=vmem, size = 0x9000, scoped, tag = 'internal scratch']
  %s0 = inlined_call_operand.vmem [shape: f32[2,32,32], index: 0, kind: input, shape index: {}]
  %s1 = inlined_call_operand.vmem [shape: f32[16,16], index: 1, kind: input, shape index: {}]
  %s2 = inlined_call_operand.vmem [shape: f32[2,4,32,8], index: 2, kind: output, shape index: {}]
  %s3 = sld [smem:[#allocation0]]
  $region41: #{dwt.1} parent=0
    _
  %s5 = ssub.s32 1, %s3
  %s6 = scalar_select 0, %s5, %s3
  loop: start=0, step=1, limit=4
  $region2: #{dwt.1} parent=0 // loop_pre_header
    _
  $region3: #{dwt.1} parent=0 // loop_header
    %s8 = sphi 0, %s12
    %p9 = scmp.ge.s32.totalorder %s8, 4
    %s15 = sphi 0, %s27
    %s16 = sphi 0, %s23
    %s17 = sphi 0, %s15
    %s18 = sphi 0, %s16
    %s19 = sphi 0, %s17
    %s20 = sphi 0, %s18
    %s32 = sphi 0, %s34
    %s35 = sphi 0, %s32
    %s36 = sphi 0, %s35
    %s52 = sphi 0, %s36
    %s56 = sphi 0, %s56
    %s58 = sphi 0, %s56
    %s59 = sphi 0, %s58
    %s73 = sphi 0, %s59
    %s81 = sphi 0, %s83
    %s84 = sphi 0, %s81
    %s85 = sphi 0, %s84
    %s101 = sphi 0, %s85
  $region4: #{dwt.1} parent=0 // loop_header_branch
    %11 = sbr.rel (%p9) target = $region8
  $region5: #{dwt.1} parent=0 // loop_body
    %s13 = ssub.s32 %s8, 1
    %s14 = ssub.s32 %s8, 2
    %s21 = sadd.s32 1, %s16
    %p22 = scmp.ge.s32.totalorder %s21, 1
    %s23 = scalar_select %p22, 0, %s21
    %s24 = sadd.s32 1, %s15
    %s25 = scalar_select %p22, %s24, %s15
    %p26 = scmp.ge.s32.totalorder %s25, 2
    %s27 = scalar_select %p26, 0, %s25
    %s28 = ssub.s32 %s15, %s27
    %s29 = ssub.s32 %s16, %s23
    %s30 = sor.u32 %s28, %s29
    %p31 = scmp.eq.s32.totalorder %s30, 0
    %s33 = sadd.s32 %s32, 1
    %s34 = scalar_select %p31, %s32, %s33
    %p37 = pneg %p31
    %p38 = scmp.eq.s32.totalorder %s8, 1
    %p39 = por %p37, %p38
    %p40 = scmp.ne.s32.totalorder %s32, %s35
    %p41 = scmp.eq.s32.totalorder %s8, 0
    %p42 = por %p40, %p41
    %p43 = scmp.ne.s32.totalorder %s32, %s35
    %p44 = scmp.eq.s32.totalorder %s13, 1
    %p45 = por %p43, %p44
    %p46 = scmp.ne.s32.totalorder %s35, %s36
    %p47 = scmp.eq.s32.totalorder %s13, 0
    %p48 = por %p46, %p47
    %p49 = scmp.ne.s32.totalorder %s35, %s36
    %p50 = scmp.eq.s32.totalorder %s14, 1
    %p51 = por %p49, %p50
    %p53 = scmp.ne.s32.totalorder %s36, %s52
    %p54 = scmp.eq.s32.totalorder %s14, 0
    %p55 = por %p53, %p54
    %s57 = sadd.s32 %s56, 1
    %p60 = scmp.eq.s32.totalorder %s8, 1
    %p61 = scmp.ne.s32.totalorder %s56, %s58
    %p62 = scmp.eq.s32.totalorder %s8, 0
    %p63 = por %p61, %p62
    %p64 = scmp.ne.s32.totalorder %s56, %s58
    %p65 = scmp.eq.s32.totalorder %s13, 1
    %p66 = por %p64, %p65
    %p67 = scmp.ne.s32.totalorder %s58, %s59
    %p68 = scmp.eq.s32.totalorder %s13, 0
    %p69 = por %p67, %p68
    %p70 = scmp.ne.s32.totalorder %s58, %s59
    %p71 = scmp.eq.s32.totalorder %s14, 1
    %p72 = por %p70, %p71
    %p74 = scmp.ne.s32.totalorder %s59, %s73
    %p75 = scmp.eq.s32.totalorder %s14, 0
    %p76 = por %p74, %p75
    %s77 = ssub.s32 %s15, %s27
    %s78 = ssub.s32 %s16, %s23
    %s79 = sor.u32 %s77, %s78
    %p80 = scmp.eq.s32.totalorder %s79, 0
    %s82 = sadd.s32 %s81, 1
    %s83 = scalar_select %p80, %s81, %s82
    %p86 = pneg %p80
    %p87 = scmp.eq.s32.totalorder %s8, 1
    %p88 = por %p86, %p87
    %p89 = scmp.ne.s32.totalorder %s81, %s84
    %p90 = scmp.eq.s32.totalorder %s8, 0
    %p91 = por %p89, %p90
    %p92 = scmp.ne.s32.totalorder %s81, %s84
    %p93 = scmp.eq.s32.totalorder %s13, 1
    %p94 = por %p92, %p93
    %p95 = scmp.ne.s32.totalorder %s84, %s85
    %p96 = scmp.eq.s32.totalorder %s13, 0
    %p97 = por %p95, %p96
    %p98 = scmp.ne.s32.totalorder %s84, %s85
    %p99 = scmp.eq.s32.totalorder %s14, 1
    %p100 = por %p98, %p99
    %p102 = scmp.ne.s32.totalorder %s85, %s101
    %p103 = scmp.eq.s32.totalorder %s14, 0
    %p104 = por %p102, %p103
    %p105 = scmp.le.s32.totalorder 1, %s8
    %p106 = scmp.lt.s32.totalorder %s8, 3
    %p107 = pnand %p105, %p106
    %p108 = pneg %p107
    // Predicated region
    $region9: #{dwt.1} parent=5 // pred_check
      _
    $region10: #{dwt.1} parent=5 // pred_check_branch
      %110 = sbr.rel (%p107) target = $region12
    $region11: #{dwt.1} parent=5 // pred_region
      %s111 = ssub.s32 %s8, 1
      // Predicated region
      $region13: #{dwt.1} parent=11 // pred_check
        %p112 = pneg %p69
      $region14: #{dwt.1} parent=11 // pred_check_branch
        %114 = sbr.rel (%p112) target = $region16
      $region15: #{dwt.1} parent=11 // pred_region
        _
      $region16: #{dwt.1} parent=11 // pred_fallthru
        _
    $region12: #{dwt.1} parent=5 // pred_fallthru
      _
    %p115 = scmp.lt.s32.totalorder %s8, 2
    // Predicated region
    $region17: #{dwt.1} parent=5 // pred_check
      %p116 = pneg %p115
    $region18: #{dwt.1} parent=5 // pred_check_branch
      %118 = sbr.rel (%p116) target = $region20
    $region19: #{dwt.1} parent=5 // pred_region
      // Predicated region
      $region21: #{dwt.1} parent=19 // pred_check
        %p119 = pneg %p42
      $region22: #{dwt.1} parent=19 // pred_check_branch
        %121 = sbr.rel (%p119) target = $region24
      $region23: #{dwt.1} parent=19 // pred_region
        %s122 = smul.u32 4, %s16
        %p123 = scmp.lt.s32.totalorder %s15, 1
        %s124 = scalar_select %p123, %s15, 1
        %p125 = scmp.lt.s32.totalorder %s122, 3
        %s126 = scalar_select %p125, %s122, 3
        %s127 = smul.addr %s124, 4
        %s128 = sadd.s32 %s126, %s127
        %s129 = smul.addr %s128, 8
        %s130 = scalar_lea.vmem %s0, %s129
        %s131 = smul.u32 4, %s16
      $region24: #{dwt.1} parent=19 // pred_fallthru
        _
    $region20: #{dwt.1} parent=5 // pred_fallthru
      _
    %p132 = scmp.le.s32.totalorder 1, %s8
    %p133 = scmp.lt.s32.totalorder %s8, 3
    %p134 = pnand %p132, %p133
    %p135 = pneg %p134
    // Predicated region
    $region25: #{dwt.1} parent=5 // pred_check
      _
    $region26: #{dwt.1} parent=5 // pred_check_branch
      %137 = sbr.rel (%p134) target = $region28
    $region27: #{dwt.1} parent=5 // pred_region
      %s138 = ssub.s32 %s8, 1
      %s139 = smul.u32 4, %s18
      %p140 = scmp.lt.s32.totalorder %s17, 1
      %s141 = scalar_select %p140, %s17, 1
      %p142 = scmp.lt.s32.totalorder %s139, 3
      %s143 = scalar_select %p142, %s139, 3
      %s144 = smul.addr %s141, 4
      %s145 = sadd.s32 %s143, %s144
      %s146 = smul.addr %s145, 8
      %s147 = scalar_lea.vmem %s0, %s146
      %p148 = pneg %p48
      %p149 = pneg %p45
      %p150 = pneg %p69
      %p151 = pneg %p66
      %p152 = pneg %p97
      %p153 = pneg %p94
      %s154 = smul.u32 4, %s18
      %p155 = scmp.lt.s32.totalorder %s17, 1
      %s156 = scalar_select %p155, %s17, 1
      %p157 = scmp.lt.s32.totalorder %s154, 3
      %s158 = scalar_select %p157, %s154, 3
      %s159 = smul.addr %s156, 16
      %s160 = sadd.s32 %s158, %s159
      %s161 = smul.addr %s160, 8
      %s162 = scalar_lea.vmem %s2, %s161
      %s163 = smul.u32 4, %s18
      %p164 = scmp.lt.s32.totalorder %s17, 1
      %s165 = scalar_select %p164, %s17, 1
      %p166 = scmp.lt.s32.totalorder %s163, 3
      %s167 = scalar_select %p166, %s163, 3
      %s168 = smul.addr %s165, 4
      %s169 = sadd.s32 %s167, %s168
      %s170 = smul.addr %s169, 8
      %s171 = scalar_lea.vmem %s0, %s170
      %s172 = smul.u32 4, %s18
      %s173 = smul.u32 4, %s18
      %p174 = scmp.lt.s32.totalorder %s17, 1
      %s175 = scalar_select %p174, %s17, 1
      %p176 = scmp.lt.s32.totalorder %s173, 3
      %s177 = scalar_select %p176, %s173, 3
      %s178 = smul.addr %s175, 16
      %s179 = sadd.s32 %s177, %s178
      %s180 = smul.addr %s179, 8
      %s181 = scalar_lea.vmem %s2, %s180
      %s182 = smul.u32 4, %s18
      %v183 = vld [vmem:[%s171] sm:$0xff]
      %v184 = vld [vmem:[%s171 + $0x8] sm:$0xff]
      %v185 = vld [vmem:[%s171 + $0x10] sm:$0xff]
      %v186 = vld [vmem:[%s171 + $0x18] sm:$0xff]
      %191 = vrot.lane.b32.xlu0 %v183, 112
      %v192 = vpop.permute.xlu0 %191
      %193 = vrot.lane.b32.xlu0 %v184, 112
      %v194 = vpop.permute.xlu0 %193
      %195 = vrot.lane.b32.xlu0 %v185, 112
      %v196 = vpop.permute.xlu0 %195
      %197 = vrot.lane.b32.xlu0 %v186, 112
      %v198 = vpop.permute.xlu0 %197
      %v203 = vadd.f32 %v183, %v192
      %v204 = vadd.f32 %v184, %v194
      %v205 = vadd.f32 %v185, %v196
      %v206 = vadd.f32 %v186, %v198
      %207 = vrot.lane.b32.xlu0 %v183, 16
      %v208 = vpop.permute.xlu0 %207
      %209 = vrot.lane.b32.xlu0 %v184, 16
      %v210 = vpop.permute.xlu0 %209
      %211 = vrot.lane.b32.xlu0 %v185, 16
      %v212 = vpop.permute.xlu0 %211
      %213 = vrot.lane.b32.xlu0 %v186, 16
      %v214 = vpop.permute.xlu0 %213
      %v219 = vsub.f32 %v183, %v208
      %v220 = vsub.f32 %v184, %v210
      %v221 = vsub.f32 %v185, %v212
      %v222 = vsub.f32 %v186, %v214
      %v223 = vld [vmem:[%s1] sm:$0xff]
      %v224 = vld [vmem:[%s1 + $0x8] sm:$0xff]
      %vm225 = vcmask 130048
      %v227 = vsel %vm225, %v203, 0
      %v230 = vsel %vm225, %v204, 0
      %v233 = vsel %vm225, %v205, 0
      %v236 = vsel %vm225, %v206, 0
      %238 = vmatpush.msra.mxu0 0.0
      %239 = vmatpush.msra.mxu0 0.0
      %240 = vmatpush.msra.mxu0 0.0
      %241 = vmatpush.msra.mxu0 0.0
      %242 = vmatpush.msra.mxu0 0.0
      %243 = vmatpush.msra.mxu0 0.0
      %244 = vmatpush.msra.mxu0 0.0
      %245 = vmatpush.msra.mxu0 0.0
      %246 = vmatpush.msra.mxu0 0.0
      %247 = vmatpush.msra.mxu0 0.0
      %248 = vmatpush.msra.mxu0 0.0
      %249 = vmatpush.msra.mxu0 0.0
      %250 = vmatpush.msra.mxu0 0.0
      %251 = vmatpush.msra.mxu0 0.0
      %v252 = vand.u32 %v224, 4294901760
      %253 = vmatpush.msra.mxu0 %v252
      %v254 = vand.u32 %v223, 4294901760
      %255 = vmatpush.msra.mxu0 %v254
      %v256 = vand.u32 %v227, 4294901760
      %v257 = vsub.f32 %v227, %v256
      %v258 = vand.u32 %v257, 4294901760
      %v259 = vsub.f32 %v257, %v258
      %v260 = vand.u32 %v259, 4294901760
      %261 = vmatmul.f32.gmra.mxu0 %v260
      %v262 = vpop.f32.mrf.mxu0
      %v263 = vadd.f32 0.0, %v262
      %v264 = vand.u32 %v230, 4294901760
      %v265 = vsub.f32 %v230, %v264
      %v266 = vand.u32 %v265, 4294901760
      %v267 = vsub.f32 %v265, %v266
      %v268 = vand.u32 %v267, 4294901760
      %269 = vmatmul.f32.gmra.mxu0 %v268
      %v270 = vpop.f32.mrf.mxu0
      %v271 = vadd.f32 0.0, %v270
      %v272 = vand.u32 %v233, 4294901760
      %v273 = vsub.f32 %v233, %v272
      %v274 = vand.u32 %v273, 4294901760
      %v275 = vsub.f32 %v273, %v274
      %v276 = vand.u32 %v275, 4294901760
      %277 = vmatmul.f32.gmra.mxu0 %v276
      %v278 = vpop.f32.mrf.mxu0
      %v279 = vadd.f32 0.0, %v278
      %v280 = vand.u32 %v236, 4294901760
      %v281 = vsub.f32 %v236, %v280
      %v282 = vand.u32 %v281, 4294901760
      %v283 = vsub.f32 %v281, %v282
      %v284 = vand.u32 %v283, 4294901760
      %285 = vmatmul.f32.gmra.mxu0 %v284
      %v286 = vpop.f32.mrf.mxu0
      %v287 = vadd.f32 0.0, %v286
      %288 = vdwg.mxu0
      %289 = vmatpush.msra.mxu0 0.0
      %290 = vmatpush.msra.mxu0 0.0
      %291 = vmatpush.msra.mxu0 0.0
      %292 = vmatpush.msra.mxu0 0.0
      %293 = vmatpush.msra.mxu0 0.0
      %294 = vmatpush.msra.mxu0 0.0
      %295 = vmatpush.msra.mxu0 0.0
      %296 = vmatpush.msra.mxu0 0.0
      %297 = vmatpush.msra.mxu0 0.0
      %298 = vmatpush.msra.mxu0 0.0
      %299 = vmatpush.msra.mxu0 0.0
      %300 = vmatpush.msra.mxu0 0.0
      %301 = vmatpush.msra.mxu0 0.0
      %302 = vmatpush.msra.mxu0 0.0
      %v303 = vand.u32 %v224, 4294901760
      %v304 = vsub.f32 %v224, %v303
      %v305 = vand.u32 %v304, 4294901760
      %v306 = vsub.f32 %v304, %v305
      %v307 = vand.u32 %v306, 4294901760
      %308 = vmatpush.msra.mxu0 %v307
      %v309 = vand.u32 %v223, 4294901760
      %v310 = vsub.f32 %v223, %v309
      %v311 = vand.u32 %v310, 4294901760
      %v312 = vsub.f32 %v310, %v311
      %v313 = vand.u32 %v312, 4294901760
      %314 = vmatpush.msra.mxu0 %v313
      %v315 = vand.u32 %v227, 4294901760
      %316 = vmatmul.f32.gmra.mxu0 %v315
      %v317 = vpop.f32.mrf.mxu0
      %v318 = vadd.f32 %v263, %v317
      %v319 = vand.u32 %v230, 4294901760
      %320 = vmatmul.f32.gmra.mxu0 %v319
      %v321 = vpop.f32.mrf.mxu0
      %v322 = vadd.f32 %v271, %v321
      %v323 = vand.u32 %v233, 4294901760
      %324 = vmatmul.f32.gmra.mxu0 %v323
      %v325 = vpop.f32.mrf.mxu0
      %v326 = vadd.f32 %v279, %v325
      %v327 = vand.u32 %v236, 4294901760
      %328 = vmatmul.f32.gmra.mxu0 %v327
      %v329 = vpop.f32.mrf.mxu0
      %v330 = vadd.f32 %v287, %v329
      %331 = vdwg.mxu0
      %332 = vmatpush.msra.mxu0 0.0
      %333 = vmatpush.msra.mxu0 0.0
      %334 = vmatpush.msra.mxu0 0.0
      %335 = vmatpush.msra.mxu0 0.0
      %336 = vmatpush.msra.mxu0 0.0
      %337 = vmatpush.msra.mxu0 0.0
      %338 = vmatpush.msra.mxu0 0.0
      %339 = vmatpush.msra.mxu0 0.0
      %340 = vmatpush.msra.mxu0 0.0
      %341 = vmatpush.msra.mxu0 0.0
      %342 = vmatpush.msra.mxu0 0.0
      %343 = vmatpush.msra.mxu0 0.0
      %344 = vmatpush.msra.mxu0 0.0
      %345 = vmatpush.msra.mxu0 0.0
      %v346 = vand.u32 %v224, 4294901760
      %v347 = vsub.f32 %v224, %v346
      %348 = vmatpush.msra.mxu0 %v347
      %v349 = vand.u32 %v223, 4294901760
      %v350 = vsub.f32 %v223, %v349
      %351 = vmatpush.msra.mxu0 %v350
      %v352 = vand.u32 %v227, 4294901760
      %v353 = vsub.f32 %v227, %v352
      %354 = vmatmul.f32.gmra.mxu0 %v353
      %v355 = vpop.f32.mrf.mxu0
      %v356 = vadd.f32 %v318, %v355
      %v357 = vand.u32 %v230, 4294901760
      %v358 = vsub.f32 %v230, %v357
      %359 = vmatmul.f32.gmra.mxu0 %v358
      %v360 = vpop.f32.mrf.mxu0
      %v361 = vadd.f32 %v322, %v360
      %v362 = vand.u32 %v233, 4294901760
      %v363 = vsub.f32 %v233, %v362
      %364 = vmatmul.f32.gmra.mxu0 %v363
      %v365 = vpop.f32.mrf.mxu0
      %v366 = vadd.f32 %v326, %v365
      %v367 = vand.u32 %v236, 4294901760
      %v368 = vsub.f32 %v236, %v367
      %369 = vmatmul.f32.gmra.mxu0 %v368
      %v370 = vpop.f32.mrf.mxu0
      %v371 = vadd.f32 %v330, %v370
      %372 = vdwg.mxu0
      %373 = vmatpush.msra.mxu0 0.0
      %374 = vmatpush.msra.mxu0 0.0
      %375 = vmatpush.msra.mxu0 0.0
      %376 = vmatpush.msra.mxu0 0.0
      %377 = vmatpush.msra.mxu0 0.0
      %378 = vmatpush.msra.mxu0 0.0
      %379 = vmatpush.msra.mxu0 0.0
      %380 = vmatpush.msra.mxu0 0.0
      %381 = vmatpush.msra.mxu0 0.0
      %382 = vmatpush.msra.mxu0 0.0
      %383 = vmatpush.msra.mxu0 0.0
      %384 = vmatpush.msra.mxu0 0.0
      %385 = vmatpush.msra.mxu0 0.0
      %386 = vmatpush.msra.mxu0 0.0
      %v387 = vand.u32 %v224, 4294901760
      %388 = vmatpush.msra.mxu0 %v387
      %v389 = vand.u32 %v223, 4294901760
      %390 = vmatpush.msra.mxu0 %v389
      %v391 = vand.u32 %v227, 4294901760
      %v392 = vsub.f32 %v227, %v391
      %v393 = vand.u32 %v392, 4294901760
      %394 = vmatmul.f32.gmra.mxu0 %v393
      %v395 = vpop.f32.mrf.mxu0
      %v396 = vadd.f32 %v356, %v395
      %v397 = vand.u32 %v230, 4294901760
      %v398 = vsub.f32 %v230, %v397
      %v399 = vand.u32 %v398, 4294901760
      %400 = vmatmul.f32.gmra.mxu0 %v399
      %v401 = vpop.f32.mrf.mxu0
      %v402 = vadd.f32 %v361, %v401
      %v403 = vand.u32 %v233, 4294901760
      %v404 = vsub.f32 %v233, %v403
      %v405 = vand.u32 %v404, 4294901760
      %406 = vmatmul.f32.gmra.mxu0 %v405
      %v407 = vpop.f32.mrf.mxu0
      %v408 = vadd.f32 %v366, %v407
      %v409 = vand.u32 %v236, 4294901760
      %v410 = vsub.f32 %v236, %v409
      %v411 = vand.u32 %v410, 4294901760
      %412 = vmatmul.f32.gmra.mxu0 %v411
      %v413 = vpop.f32.mrf.mxu0
      %v414 = vadd.f32 %v371, %v413
      %415 = vdwg.mxu0
      %416 = vmatpush.msra.mxu0 0.0
      %417 = vmatpush.msra.mxu0 0.0
      %418 = vmatpush.msra.mxu0 0.0
      %419 = vmatpush.msra.mxu0 0.0
      %420 = vmatpush.msra.mxu0 0.0
      %421 = vmatpush.msra.mxu0 0.0
      %422 = vmatpush.msra.mxu0 0.0
      %423 = vmatpush.msra.mxu0 0.0
      %424 = vmatpush.msra.mxu0 0.0
      %425 = vmatpush.msra.mxu0 0.0
      %426 = vmatpush.msra.mxu0 0.0
      %427 = vmatpush.msra.mxu0 0.0
      %428 = vmatpush.msra.mxu0 0.0
      %429 = vmatpush.msra.mxu0 0.0
      %v430 = vand.u32 %v224, 4294901760
      %v431 = vsub.f32 %v224, %v430
      %v432 = vand.u32 %v431, 4294901760
      %433 = vmatpush.msra.mxu0 %v432
      %v434 = vand.u32 %v223, 4294901760
      %v435 = vsub.f32 %v223, %v434
      %v436 = vand.u32 %v435, 4294901760
      %437 = vmatpush.msra.mxu0 %v436
      %v438 = vand.u32 %v227, 4294901760
      %439 = vmatmul.f32.gmra.mxu0 %v438
      %v440 = vpop.f32.mrf.mxu0
      %v441 = vadd.f32 %v396, %v440
      %v442 = vand.u32 %v230, 4294901760
      %443 = vmatmul.f32.gmra.mxu0 %v442
      %v444 = vpop.f32.mrf.mxu0
      %v445 = vadd.f32 %v402, %v444
      %v446 = vand.u32 %v233, 4294901760
      %447 = vmatmul.f32.gmra.mxu0 %v446
      %v448 = vpop.f32.mrf.mxu0
      %v449 = vadd.f32 %v408, %v448
      %v450 = vand.u32 %v236, 4294901760
      %451 = vmatmul.f32.gmra.mxu0 %v450
      %v452 = vpop.f32.mrf.mxu0
      %v453 = vadd.f32 %v414, %v452
      %454 = vdwg.mxu0
      %455 = vmatpush.msra.mxu0 0.0
      %456 = vmatpush.msra.mxu0 0.0
      %457 = vmatpush.msra.mxu0 0.0
      %458 = vmatpush.msra.mxu0 0.0
      %459 = vmatpush.msra.mxu0 0.0
      %460 = vmatpush.msra.mxu0 0.0
      %461 = vmatpush.msra.mxu0 0.0
      %462 = vmatpush.msra.mxu0 0.0
      %463 = vmatpush.msra.mxu0 0.0
      %464 = vmatpush.msra.mxu0 0.0
      %465 = vmatpush.msra.mxu0 0.0
      %466 = vmatpush.msra.mxu0 0.0
      %467 = vmatpush.msra.mxu0 0.0
      %468 = vmatpush.msra.mxu0 0.0
      %v469 = vand.u32 %v224, 4294901760
      %470 = vmatpush.msra.mxu0 %v469
      %v471 = vand.u32 %v223, 4294901760
      %472 = vmatpush.msra.mxu0 %v471
      %v473 = vand.u32 %v227, 4294901760
      %474 = vmatmul.f32.gmra.mxu0 %v473
      %v475 = vpop.f32.mrf.mxu0
      %v476 = vadd.f32 %v441, %v475
      %v477 = vand.u32 %v230, 4294901760
      %478 = vmatmul.f32.gmra.mxu0 %v477
      %v479 = vpop.f32.mrf.mxu0
      %v480 = vadd.f32 %v445, %v479
      %v481 = vand.u32 %v233, 4294901760
      %482 = vmatmul.f32.gmra.mxu0 %v481
      %v483 = vpop.f32.mrf.mxu0
      %v484 = vadd.f32 %v449, %v483
      %v485 = vand.u32 %v236, 4294901760
      %486 = vmatmul.f32.gmra.mxu0 %v485
      %v487 = vpop.f32.mrf.mxu0
      %v488 = vadd.f32 %v453, %v487
      %489 = vdwg.mxu0
      %494 = vrot.lane.b32.xlu0 %v219, 112
      %v495 = vpop.permute.xlu0 %494
      %496 = vrot.lane.b32.xlu0 %v220, 112
      %v497 = vpop.permute.xlu0 %496
      %498 = vrot.lane.b32.xlu0 %v221, 112
      %v499 = vpop.permute.xlu0 %498
      %500 = vrot.lane.b32.xlu0 %v222, 112
      %v501 = vpop.permute.xlu0 %500
      %v502 = vsel %vm225, %v495, 0
      %v504 = vsel %vm225, %v497, 0
      %v506 = vsel %vm225, %v499, 0
      %v508 = vsel %vm225, %v501, 0
      %510 = vmatpush.msra.mxu0 0.0
      %511 = vmatpush.msra.mxu0 0.0
      %512 = vmatpush.msra.mxu0 0.0
      %513 = vmatpush.msra.mxu0 0.0
      %514 = vmatpush.msra.mxu0 0.0
      %515 = vmatpush.msra.mxu0 0.0
      %516 = vmatpush.msra.mxu0 0.0
      %517 = vmatpush.msra.mxu0 0.0
      %518 = vmatpush.msra.mxu0 0.0
      %519 = vmatpush.msra.mxu0 0.0
      %520 = vmatpush.msra.mxu0 0.0
      %521 = vmatpush.msra.mxu0 0.0
      %522 = vmatpush.msra.mxu0 0.0
      %523 = vmatpush.msra.mxu0 0.0
      %v524 = vand.u32 %v224, 4294901760
      %525 = vmatpush.msra.mxu0 %v524
      %v526 = vand.u32 %v223, 4294901760
      %527 = vmatpush.msra.mxu0 %v526
      %v528 = vand.u32 %v502, 4294901760
      %v529 = vsub.f32 %v502, %v528
      %v530 = vand.u32 %v529, 4294901760
      %v531 = vsub.f32 %v529, %v530
      %v532 = vand.u32 %v531, 4294901760
      %533 = vmatmul.f32.gmra.mxu0 %v532
      %v534 = vpop.f32.mrf.mxu0
      %v535 = vadd.f32 0.0, %v534
      %v536 = vand.u32 %v504, 4294901760
      %v537 = vsub.f32 %v504, %v536
      %v538 = vand.u32 %v537, 4294901760
      %v539 = vsub.f32 %v537, %v538
      %v540 = vand.u32 %v539, 4294901760
      %541 = vmatmul.f32.gmra.mxu0 %v540
      %v542 = vpop.f32.mrf.mxu0
      %v543 = vadd.f32 0.0, %v542
      %v544 = vand.u32 %v506, 4294901760
      %v545 = vsub.f32 %v506, %v544
      %v546 = vand.u32 %v545, 4294901760
      %v547 = vsub.f32 %v545, %v546
      %v548 = vand.u32 %v547, 4294901760
      %549 = vmatmul.f32.gmra.mxu0 %v548
      %v550 = vpop.f32.mrf.mxu0
      %v551 = vadd.f32 0.0, %v550
      %v552 = vand.u32 %v508, 4294901760
      %v553 = vsub.f32 %v508, %v552
      %v554 = vand.u32 %v553, 4294901760
      %v555 = vsub.f32 %v553, %v554
      %v556 = vand.u32 %v555, 4294901760
      %557 = vmatmul.f32.gmra.mxu0 %v556
      %v558 = vpop.f32.mrf.mxu0
      %v559 = vadd.f32 0.0, %v558
      %560 = vdwg.mxu0
      %561 = vmatpush.msra.mxu0 0.0
      %562 = vmatpush.msra.mxu0 0.0
      %563 = vmatpush.msra.mxu0 0.0
      %564 = vmatpush.msra.mxu0 0.0
      %565 = vmatpush.msra.mxu0 0.0
      %566 = vmatpush.msra.mxu0 0.0
      %567 = vmatpush.msra.mxu0 0.0
      %568 = vmatpush.msra.mxu0 0.0
      %569 = vmatpush.msra.mxu0 0.0
      %570 = vmatpush.msra.mxu0 0.0
      %571 = vmatpush.msra.mxu0 0.0
      %572 = vmatpush.msra.mxu0 0.0
      %573 = vmatpush.msra.mxu0 0.0
      %574 = vmatpush.msra.mxu0 0.0
      %v575 = vand.u32 %v224, 4294901760
      %v576 = vsub.f32 %v224, %v575
      %v577 = vand.u32 %v576, 4294901760
      %v578 = vsub.f32 %v576, %v577
      %v579 = vand.u32 %v578, 4294901760
      %580 = vmatpush.msra.mxu0 %v579
      %v581 = vand.u32 %v223, 4294901760
      %v582 = vsub.f32 %v223, %v581
      %v583 = vand.u32 %v582, 4294901760
      %v584 = vsub.f32 %v582, %v583
      %v585 = vand.u32 %v584, 4294901760
      %586 = vmatpush.msra.mxu0 %v585
      %v587 = vand.u32 %v502, 4294901760
      %588 = vmatmul.f32.gmra.mxu0 %v587
      %v589 = vpop.f32.mrf.mxu0
      %v590 = vadd.f32 %v535, %v589
      %v591 = vand.u32 %v504, 4294901760
      %592 = vmatmul.f32.gmra.mxu0 %v591
      %v593 = vpop.f32.mrf.mxu0
      %v594 = vadd.f32 %v543, %v593
      %v595 = vand.u32 %v506, 4294901760
      %596 = vmatmul.f32.gmra.mxu0 %v595
      %v597 = vpop.f32.mrf.mxu0
      %v598 = vadd.f32 %v551, %v597
      %v599 = vand.u32 %v508, 4294901760
      %600 = vmatmul.f32.gmra.mxu0 %v599
      %v601 = vpop.f32.mrf.mxu0
      %v602 = vadd.f32 %v559, %v601
      %603 = vdwg.mxu0
      %604 = vmatpush.msra.mxu0 0.0
      %605 = vmatpush.msra.mxu0 0.0
      %606 = vmatpush.msra.mxu0 0.0
      %607 = vmatpush.msra.mxu0 0.0
      %608 = vmatpush.msra.mxu0 0.0
      %609 = vmatpush.msra.mxu0 0.0
      %610 = vmatpush.msra.mxu0 0.0
      %611 = vmatpush.msra.mxu0 0.0
      %612 = vmatpush.msra.mxu0 0.0
      %613 = vmatpush.msra.mxu0 0.0
      %614 = vmatpush.msra.mxu0 0.0
      %615 = vmatpush.msra.mxu0 0.0
      %616 = vmatpush.msra.mxu0 0.0
      %617 = vmatpush.msra.mxu0 0.0
      %v618 = vand.u32 %v224, 4294901760
      %v619 = vsub.f32 %v224, %v618
      %620 = vmatpush.msra.mxu0 %v619
      %v621 = vand.u32 %v223, 4294901760
      %v622 = vsub.f32 %v223, %v621
      %623 = vmatpush.msra.mxu0 %v622
      %v624 = vand.u32 %v502, 4294901760
      %v625 = vsub.f32 %v502, %v624
      %626 = vmatmul.f32.gmra.mxu0 %v625
      %v627 = vpop.f32.mrf.mxu0
      %v628 = vadd.f32 %v590, %v627
      %v629 = vand.u32 %v504, 4294901760
      %v630 = vsub.f32 %v504, %v629
      %631 = vmatmul.f32.gmra.mxu0 %v630
      %v632 = vpop.f32.mrf.mxu0
      %v633 = vadd.f32 %v594, %v632
      %v634 = vand.u32 %v506, 4294901760
      %v635 = vsub.f32 %v506, %v634
      %636 = vmatmul.f32.gmra.mxu0 %v635
      %v637 = vpop.f32.mrf.mxu0
      %v638 = vadd.f32 %v598, %v637
      %v639 = vand.u32 %v508, 4294901760
      %v640 = vsub.f32 %v508, %v639
      %641 = vmatmul.f32.gmra.mxu0 %v640
      %v642 = vpop.f32.mrf.mxu0
      %v643 = vadd.f32 %v602, %v642
      %644 = vdwg.mxu0
      %645 = vmatpush.msra.mxu0 0.0
      %646 = vmatpush.msra.mxu0 0.0
      %647 = vmatpush.msra.mxu0 0.0
      %648 = vmatpush.msra.mxu0 0.0
      %649 = vmatpush.msra.mxu0 0.0
      %650 = vmatpush.msra.mxu0 0.0
      %651 = vmatpush.msra.mxu0 0.0
      %652 = vmatpush.msra.mxu0 0.0
      %653 = vmatpush.msra.mxu0 0.0
      %654 = vmatpush.msra.mxu0 0.0
      %655 = vmatpush.msra.mxu0 0.0
      %656 = vmatpush.msra.mxu0 0.0
      %657 = vmatpush.msra.mxu0 0.0
      %658 = vmatpush.msra.mxu0 0.0
      %v659 = vand.u32 %v224, 4294901760
      %660 = vmatpush.msra.mxu0 %v659
      %v661 = vand.u32 %v223, 4294901760
      %662 = vmatpush.msra.mxu0 %v661
      %v663 = vand.u32 %v502, 4294901760
      %v664 = vsub.f32 %v502, %v663
      %v665 = vand.u32 %v664, 4294901760
      %666 = vmatmul.f32.gmra.mxu0 %v665
      %v667 = vpop.f32.mrf.mxu0
      %v668 = vadd.f32 %v628, %v667
      %v669 = vand.u32 %v504, 4294901760
      %v670 = vsub.f32 %v504, %v669
      %v671 = vand.u32 %v670, 4294901760
      %672 = vmatmul.f32.gmra.mxu0 %v671
      %v673 = vpop.f32.mrf.mxu0
      %v674 = vadd.f32 %v633, %v673
      %v675 = vand.u32 %v506, 4294901760
      %v676 = vsub.f32 %v506, %v675
      %v677 = vand.u32 %v676, 4294901760
      %678 = vmatmul.f32.gmra.mxu0 %v677
      %v679 = vpop.f32.mrf.mxu0
      %v680 = vadd.f32 %v638, %v679
      %v681 = vand.u32 %v508, 4294901760
      %v682 = vsub.f32 %v508, %v681
      %v683 = vand.u32 %v682, 4294901760
      %684 = vmatmul.f32.gmra.mxu0 %v683
      %v685 = vpop.f32.mrf.mxu0
      %v686 = vadd.f32 %v643, %v685
      %687 = vdwg.mxu0
      %688 = vmatpush.msra.mxu0 0.0
      %689 = vmatpush.msra.mxu0 0.0
      %690 = vmatpush.msra.mxu0 0.0
      %691 = vmatpush.msra.mxu0 0.0
      %692 = vmatpush.msra.mxu0 0.0
      %693 = vmatpush.msra.mxu0 0.0
      %694 = vmatpush.msra.mxu0 0.0
      %695 = vmatpush.msra.mxu0 0.0
      %696 = vmatpush.msra.mxu0 0.0
      %697 = vmatpush.msra.mxu0 0.0
      %698 = vmatpush.msra.mxu0 0.0
      %699 = vmatpush.msra.mxu0 0.0
      %700 = vmatpush.msra.mxu0 0.0
      %701 = vmatpush.msra.mxu0 0.0
      %v702 = vand.u32 %v224, 4294901760
      %v703 = vsub.f32 %v224, %v702
      %v704 = vand.u32 %v703, 4294901760
      %705 = vmatpush.msra.mxu0 %v704
      %v706 = vand.u32 %v223, 4294901760
      %v707 = vsub.f32 %v223, %v706
      %v708 = vand.u32 %v707, 4294901760
      %709 = vmatpush.msra.mxu0 %v708
      %v710 = vand.u32 %v502, 4294901760
      %711 = vmatmul.f32.gmra.mxu0 %v710
      %v712 = vpop.f32.mrf.mxu0
      %v713 = vadd.f32 %v668, %v712
      %v714 = vand.u32 %v504, 4294901760
      %715 = vmatmul.f32.gmra.mxu0 %v714
      %v716 = vpop.f32.mrf.mxu0
      %v717 = vadd.f32 %v674, %v716
      %v718 = vand.u32 %v506, 4294901760
      %719 = vmatmul.f32.gmra.mxu0 %v718
      %v720 = vpop.f32.mrf.mxu0
      %v721 = vadd.f32 %v680, %v720
      %v722 = vand.u32 %v508, 4294901760
      %723 = vmatmul.f32.gmra.mxu0 %v722
      %v724 = vpop.f32.mrf.mxu0
      %v725 = vadd.f32 %v686, %v724
      %726 = vdwg.mxu0
      %727 = vmatpush.msra.mxu0 0.0
      %728 = vmatpush.msra.mxu0 0.0
      %729 = vmatpush.msra.mxu0 0.0
      %730 = vmatpush.msra.mxu0 0.0
      %731 = vmatpush.msra.mxu0 0.0
      %732 = vmatpush.msra.mxu0 0.0
      %733 = vmatpush.msra.mxu0 0.0
      %734 = vmatpush.msra.mxu0 0.0
      %735 = vmatpush.msra.mxu0 0.0
      %736 = vmatpush.msra.mxu0 0.0
      %737 = vmatpush.msra.mxu0 0.0
      %738 = vmatpush.msra.mxu0 0.0
      %739 = vmatpush.msra.mxu0 0.0
      %740 = vmatpush.msra.mxu0 0.0
      %v741 = vand.u32 %v224, 4294901760
      %742 = vmatpush.msra.mxu0 %v741
      %v743 = vand.u32 %v223, 4294901760
      %744 = vmatpush.msra.mxu0 %v743
      %v745 = vand.u32 %v502, 4294901760
      %746 = vmatmul.f32.gmra.mxu0 %v745
      %v747 = vpop.f32.mrf.mxu0
      %v748 = vadd.f32 %v713, %v747
      %v749 = vand.u32 %v504, 4294901760
      %750 = vmatmul.f32.gmra.mxu0 %v749
      %v751 = vpop.f32.mrf.mxu0
      %v752 = vadd.f32 %v717, %v751
      %v753 = vand.u32 %v506, 4294901760
      %754 = vmatmul.f32.gmra.mxu0 %v753
      %v755 = vpop.f32.mrf.mxu0
      %v756 = vadd.f32 %v721, %v755
      %v757 = vand.u32 %v508, 4294901760
      %758 = vmatmul.f32.gmra.mxu0 %v757
      %v759 = vpop.f32.mrf.mxu0
      %v760 = vadd.f32 %v725, %v759
      %761 = vdwg.mxu0
      %vm762 = vcmask 64512
      %763 = vst.msk [vmem:[%s181] sm:$0xff] %vm762, %v476
      %764 = vst.msk [vmem:[%s181 + $0x8] sm:$0xff] %vm762, %v480
      %765 = vst.msk [vmem:[%s181 + $0x10] sm:$0xff] %vm762, %v484
      %766 = vst.msk [vmem:[%s181 + $0x18] sm:$0xff] %vm762, %v488
      %771 = vrot.lane.b32.xlu0 %v476, 120
      %v772 = vpop.permute.xlu0 %771
      %773 = vrot.lane.b32.xlu0 %v480, 120
      %v774 = vpop.permute.xlu0 %773
      %775 = vrot.lane.b32.xlu0 %v484, 120
      %v776 = vpop.permute.xlu0 %775
      %777 = vrot.lane.b32.xlu0 %v488, 120
      %v778 = vpop.permute.xlu0 %777
      %s783 = scalar_lea.vmem %s181, 32
      %784 = vst.msk [vmem:[%s783] sm:$0xff] %vm762, %v772
      %785 = vst.msk [vmem:[%s783 + $0x8] sm:$0xff] %vm762, %v774
      %786 = vst.msk [vmem:[%s783 + $0x10] sm:$0xff] %vm762, %v776
      %787 = vst.msk [vmem:[%s783 + $0x18] sm:$0xff] %vm762, %v778
      %s788 = scalar_lea.vmem %s181, 64
      %789 = vst.msk [vmem:[%s788] sm:$0xff] %vm762, %v748
      %790 = vst.msk [vmem:[%s788 + $0x8] sm:$0xff] %vm762, %v752
      %791 = vst.msk [vmem:[%s788 + $0x10] sm:$0xff] %vm762, %v756
      %792 = vst.msk [vmem:[%s788 + $0x18] sm:$0xff] %vm762, %v760
      %797 = vrot.lane.b32.xlu0 %v748, 120
      %v798 = vpop.permute.xlu0 %797
      %799 = vrot.lane.b32.xlu0 %v752, 120
      %v800 = vpop.permute.xlu0 %799
      %801 = vrot.lane.b32.xlu0 %v756, 120
      %v802 = vpop.permute.xlu0 %801
      %803 = vrot.lane.b32.xlu0 %v760, 120
      %v804 = vpop.permute.xlu0 %803
      %s809 = scalar_lea.vmem %s181, 96
      %810 = vst.msk [vmem:[%s809] sm:$0xff] %vm762, %v798
      %811 = vst.msk [vmem:[%s809 + $0x8] sm:$0xff] %vm762, %v800
      %812 = vst.msk [vmem:[%s809 + $0x10] sm:$0xff] %vm762, %v802
      %813 = vst.msk [vmem:[%s809 + $0x18] sm:$0xff] %vm762, %v804
      %s814 = smul.u32 4, %s18
      %p815 = scmp.lt.s32.totalorder %s17, 1
      %s816 = scalar_select %p815, %s17, 1
      %p817 = scmp.lt.s32.totalorder %s814, 3
      %s818 = scalar_select %p817, %s814, 3
      %s819 = smul.addr %s816, 16
      %s820 = sadd.s32 %s818, %s819
      %s821 = smul.addr %s820, 8
      %s822 = scalar_lea.vmem %s2, %s821
      // Predicated region
      $region29: #{dwt.1} parent=27 // pred_check
        %p823 = pneg %p94
      $region30: #{dwt.1} parent=27 // pred_check_branch
        %825 = sbr.rel (%p823) target = $region32
      $region31: #{dwt.1} parent=27 // pred_region
        %s826 = smul.u32 4, %s18
      $region32: #{dwt.1} parent=27 // pred_fallthru
        _
    $region28: #{dwt.1} parent=5 // pred_fallthru
      _
    %p827 = scmp.le.s32.totalorder 2, %s8
    // Predicated region
    $region33: #{dwt.1} parent=5 // pred_check
      %p828 = pneg %p827
    $region34: #{dwt.1} parent=5 // pred_check_branch
      %830 = sbr.rel (%p828) target = $region36
    $region35: #{dwt.1} parent=5 // pred_region
      %s831 = ssub.s32 %s8, 2
      // Predicated region
      $region37: #{dwt.1} parent=35 // pred_check
        %p832 = pneg %p100
      $region38: #{dwt.1} parent=35 // pred_check_branch
        %834 = sbr.rel (%p832) target = $region40
      $region39: #{dwt.1} parent=35 // pred_region
        %s835 = smul.u32 4, %s20
        %p836 = scmp.lt.s32.totalorder %s19, 1
        %s837 = scalar_select %p836, %s19, 1
        %p838 = scmp.lt.s32.totalorder %s835, 3
        %s839 = scalar_select %p838, %s835, 3
        %s840 = smul.addr %s837, 16
        %s841 = sadd.s32 %s839, %s840
        %s842 = smul.addr %s841, 8
        %s843 = scalar_lea.vmem %s2, %s842
      $region40: #{dwt.1} parent=35 // pred_fallthru
        _
    $region36: #{dwt.1} parent=5 // pred_fallthru
      _
  $region6: #{dwt.1} parent=0 // loop_footer
    %s12 = sadd.s32 1, %s8
  $region7: #{dwt.1} parent=0 // loop_footer_branch
    %7 = sbr.rel target = $region3
  $region8: #{dwt.1} parent=0 // loop_exit
    _

</llo_original>
